<compile_context>
chip_gen: v7x
topology: tpu7x:2x2x1
jax: 0.10.0
libtpu: 0.0.40
codegen_flags: <defaults>
</compile_context>

<pallas_src>
import jax
import jax.numpy as jnp
from jax.experimental import pallas as pl
from jax.experimental.pallas import tpu as pltpu


def _round_up(x, m):
    return (x + m - 1) // m * m


def _pick_tile(n, prefs):
    for t in prefs:
        if n % t == 0:
            return t
    return 128  # n is always a multiple of 128 by construction


def rgcn_history_kernel(a_ref, xw_ref, x_ref, wloop_ref, b_ref,
                        hist_ref, map_ref, out_ref):
    r = pl.program_id(1)          # relation (reduction)
    k = pl.program_id(2)          # src-column tile (reduction)
    nr = pl.num_programs(1)
    nk = pl.num_programs(2)

    @pl.when(jnp.logical_and(r == 0, k == 0))
    def _():
        # Self-loop + bias folded into the accumulator init; this small matmul is
        # hidden under the first A-tile DMA instead of serializing the epilogue.
        out_ref[...] = (jnp.dot(x_ref[...], wloop_ref[...],
                                preferred_element_type=jnp.float32)
                        + b_ref[...])

    # A tile is stored bf16 (exact small-integer edge counts); upcast and do an
    # f32-accumulated MXU matmul against the f32 XW tile.
    out_ref[...] += jnp.dot(a_ref[0].astype(jnp.float32), xw_ref[0],
                            preferred_element_type=jnp.float32)

    @pl.when(jnp.logical_and(r == nr - 1, k == nk - 1))
    def _():
        # History override fused into the last reduction step for this row tile.
        valid = map_ref[...] != -1                    # [TV, 1] broadcasts over Hp
        out_ref[...] = jnp.where(valid, hist_ref[...], out_ref[...])


def dgl_rgcn_history_forward(src, dst, etypes, x, history_map, history_buffer,
                             weight, loop_weight, bias, num_rel, history_size=1):
    N, C_in = x.shape
    H = weight.shape[-1]
    f32 = jnp.float32

    # Lane-dense feature axis and tileable node axis.
    Hp = _round_up(H, 128)
    Np = _round_up(N, 128)
    TV = _pick_tile(Np, (512, 256, 128))   # dst-row tile (parallel grid axis)
    TU = _pick_tile(Np, (512, 256, 128))   # src-col tile (reduction grid axis)

    x_pad = jnp.pad(x.astype(f32), ((0, Np - N), (0, 0)))              # [Np, C_in]
    w_pad = jnp.pad(weight.astype(f32), ((0, 0), (0, 0), (0, Hp - H)))  # [R, C_in, Hp]
    wloop_pad = jnp.pad(loop_weight.astype(f32), ((0, 0), (0, Hp - H)))  # [C_in, Hp]
    bias_pad = jnp.pad(bias.astype(f32), (0, Hp - H)).reshape(1, Hp)     # [1, Hp]

    # Hoisted feature transform: one batched matmul for all relations.
    xw = jnp.einsum('nc,rch->rnh', x_pad, w_pad,
                    precision=jax.lax.Precision.HIGHEST)                # [R, Np, Hp] f32

    # Dense per-relation adjacency, built directly in bf16 (edge counts <= 256 exact).
    A = jnp.zeros((num_rel, Np, Np), dtype=jnp.bfloat16)
    A = A.at[etypes, dst, src].add(jnp.bfloat16(1.0))

    # History plumbing (data-dependent row gather kept in plain-JAX glue).
    if history_size == 0:
        hmap = jnp.full((N,), -1, dtype=jnp.int32)
        hist_g = jnp.zeros((N, Hp), dtype=f32)
    else:
        hmap = history_map.astype(jnp.int32)
        hb_pad = jnp.pad(history_buffer.astype(f32), ((0, 0), (0, Hp - H)))
        hist_g = hb_pad[jnp.clip(hmap, 0)]                              # [N, Hp]
    hist_g = jnp.pad(hist_g, ((0, Np - N), (0, 0)))                     # [Np, Hp]
    hmap2d = jnp.pad(hmap.reshape(N, 1), ((0, Np - N), (0, 0)),
                     constant_values=-1)                                # [Np, 1]

    grid = (Np // TV, num_rel, Np // TU)

    out_pad = pl.pallas_call(
        rgcn_history_kernel,
        out_shape=jax.ShapeDtypeStruct((Np, Hp), jnp.float32),
        grid_spec=pltpu.PrefetchScalarGridSpec(
            num_scalar_prefetch=0,
            grid=grid,
            in_specs=[
                pl.BlockSpec((1, TV, TU), lambda i, r, k: (r, i, k)),   # A tile (bf16)
                pl.BlockSpec((1, TU, Hp), lambda i, r, k: (r, k, 0)),   # XW tile (f32)
                pl.BlockSpec((TV, C_in), lambda i, r, k: (i, 0)),       # X dst rows (self-loop)
                pl.BlockSpec((C_in, Hp), lambda i, r, k: (0, 0)),       # W_loop
                pl.BlockSpec((1, Hp), lambda i, r, k: (0, 0)),          # bias
                pl.BlockSpec((TV, Hp), lambda i, r, k: (i, 0)),         # gathered history rows
                pl.BlockSpec((TV, 1), lambda i, r, k: (i, 0)),          # history map
            ],
            out_specs=pl.BlockSpec((TV, Hp), lambda i, r, k: (i, 0)),
        ),
        compiler_params=pltpu.CompilerParams(
            dimension_semantics=("parallel", "arbitrary", "arbitrary"),
            vmem_limit_bytes=32 * 1024 * 1024,
        ),
    )(A, xw, x_pad, wloop_pad, bias_pad, hist_g, hmap2d)

    out = out_pad[:N, :H].astype(x.dtype)
    if history_size == 0:
        return out, None
    # `his = output` alias in the PyTorch module -> both carry the override.
    return out, out


def _reference(src, dst, etypes, x, history_map, history_buffer,
               weight, loop_weight, bias, num_rel):
    N = x.shape[0]
    hi = jax.lax.Precision.HIGHEST
    A = jnp.zeros((num_rel, N, N), dtype=jnp.float32)
    A = A.at[etypes, dst, src].add(1.0)
    conv = sum(jnp.matmul(A[r], jnp.matmul(x, weight[r], precision=hi), precision=hi)
               for r in range(num_rel))
    conv = conv + jnp.matmul(x, loop_weight, precision=hi) + bias[None, :]
    valid = (history_map != -1)[:, None]
    out = jnp.where(valid, history_buffer[jnp.clip(history_map, 0)], conv)
    return out


if __name__ == "__main__":
    key = jax.random.PRNGKey(0)
    N, C_in, H, R, E, HB = 16, 8, 32, 3, 40, 10   # nodes, in, hidden, relations, edges, hist rows

    ks = jax.random.split(key, 8)
    x = jax.random.normal(ks[0], (N, C_in), dtype=jnp.float32)
    src = jax.random.randint(ks[1], (E,), 0, N, dtype=jnp.int32)
    dst = jax.random.randint(ks[2], (E,), 0, N, dtype=jnp.int32)
    etypes = jax.random.randint(ks[3], (E,), 0, R, dtype=jnp.int32)

    # RelGraphConv parameters: W [R, C_in, H], self-loop W [C_in, H], bias [H]
    weight = 0.1 * jax.random.normal(ks[4], (R, C_in, H), dtype=jnp.float32)
    loop_weight = 0.1 * jax.random.normal(ks[5], (C_in, H), dtype=jnp.float32)
    bias = 0.1 * jax.random.normal(ks[6], (H,), dtype=jnp.float32)

    history_buffer = jax.random.normal(ks[7], (HB, H), dtype=jnp.float32)
    # roughly half the nodes hit the history buffer
    history_map = jnp.where(jnp.arange(N) % 2 == 0,
                            jnp.arange(N) % HB,
                            -1).astype(jnp.int32)

    out, his = dgl_rgcn_history_forward(src, dst, etypes, x, history_map,
                                        history_buffer, weight, loop_weight,
                                        bias, R, history_size=1)
    out = jax.block_until_ready(out)
    his = jax.block_until_ready(his)

    ref = _reference(src, dst, etypes, x, history_map, history_buffer,
                     weight, loop_weight, bias, R)
    assert jnp.allclose(out, ref, atol=1e-3, rtol=1e-3), "mismatch vs reference"
    assert jnp.allclose(his, ref, atol=1e-3, rtol=1e-3), "mismatch vs reference (his)"

    # num_rel == 1 regression check (init + finalize fire in the same grid step).
    out1, _ = dgl_rgcn_history_forward(src, dst, jnp.zeros_like(etypes), x, history_map,
                                       history_buffer, weight, loop_weight, bias, 1,
                                       history_size=1)
    ref1 = _reference(src, dst, jnp.zeros_like(etypes), x, history_map,
                      history_buffer, weight, loop_weight, bias, 1)
    assert jnp.allclose(jax.block_until_ready(out1), ref1, atol=1e-3, rtol=1e-3), \
        "mismatch vs reference (num_rel=1)"

    print("KERNEL_OK")
</pallas_src>

<mosaic_0001>
module attributes {stable_mosaic.version = 11 : i64} {
  func.func @rgcn_history_kernel(%arg0: i32, %arg1: i32, %arg2: i32, %arg3: memref<1x128x128xbf16, #tpu.memory_space<vmem>>, %arg4: memref<1x128x128xf32, #tpu.memory_space<vmem>>, %arg5: memref<128x8xf32, #tpu.memory_space<vmem>>, %arg6: memref<8x128xf32, #tpu.memory_space<vmem>>, %arg7: memref<1x128xf32, #tpu.memory_space<vmem>>, %arg8: memref<128x128xf32, #tpu.memory_space<vmem>>, %arg9: memref<128x1xi32, #tpu.memory_space<vmem>>, %arg10: memref<128x128xf32, #tpu.memory_space<vmem>>) attributes {dimension_semantics = [#tpu.dimension_semantics<parallel>, #tpu.dimension_semantics<arbitrary>, #tpu.dimension_semantics<arbitrary>], iteration_bounds = array<i64: 1, 3, 1>, scalar_prefetch = 0 : i64, scratch_operands = 0 : i64, tpu.core_type = #tpu.core_type<tc>, window_params = [{transform_indices = @transform_0, window_bounds = array<i64: 1, 128, 128>}, {transform_indices = @transform_1, window_bounds = array<i64: 1, 128, 128>}, {transform_indices = @transform_2, window_bounds = array<i64: 128, 8>}, {pipeline_mode = #tpu.pipeline_mode<synchronous>, transform_indices = @transform_3, window_bounds = array<i64: 8, 128>}, {pipeline_mode = #tpu.pipeline_mode<synchronous>, transform_indices = @transform_4, window_bounds = array<i64: 1, 128>}, {transform_indices = @transform_5, window_bounds = array<i64: 128, 128>}, {transform_indices = @transform_6, window_bounds = array<i64: 128, 1>}, {transform_indices = @transform_7, window_bounds = array<i64: 128, 128>}]} {
    %c0_i32 = arith.constant 0 : i32
    %0 = arith.cmpi eq, %arg1, %c0_i32 : i32
    %c0_i32_0 = arith.constant 0 : i32
    %1 = arith.cmpi eq, %arg2, %c0_i32_0 : i32
    %2 = arith.andi %0, %1 : i1
    %3 = arith.extui %2 : i1 to i32
    %c0_i32_1 = arith.constant 0 : i32
    %4 = arith.cmpi ne, %3, %c0_i32_1 : i32
    scf.if %4 {
      %c0_13 = arith.constant 0 : index
      %c0_14 = arith.constant 0 : index
      %19 = vector.load %arg5[%c0_13, %c0_14] : memref<128x8xf32, #tpu.memory_space<vmem>>, vector<128x8xf32>
      %c0_15 = arith.constant 0 : index
      %c0_16 = arith.constant 0 : index
      %20 = vector.load %arg6[%c0_15, %c0_16] : memref<8x128xf32, #tpu.memory_space<vmem>>, vector<8x128xf32>
      %cst_17 = arith.constant dense<0.000000e+00> : vector<128x128xf32>
      %21 = tpu.matmul %19, %20, %cst_17 {dimension_numbers = #tpu.dot_dimension_numbers<[1], [0], [0], [1], [0, 0, 1, 1], [], []>} : vector<128x8xf32>, vector<8x128xf32>, vector<128x128xf32> -> vector<128x128xf32>
      %c0_18 = arith.constant 0 : index
      %c0_19 = arith.constant 0 : index
      %22 = vector.load %arg7[%c0_18, %c0_19] : memref<1x128xf32, #tpu.memory_space<vmem>>, vector<1x128xf32>
      %23 = vector.broadcast %22 : vector<1x128xf32> to vector<128x128xf32>
      %24 = arith.addf %21, %23 : vector<128x128xf32>
      %c0_20 = arith.constant 0 : index
      %c0_21 = arith.constant 0 : index
      %25 = vector.load %arg10[%c0_20, %c0_21] : memref<128x128xf32, #tpu.memory_space<vmem>>, vector<128x128xf32>
      tpu.vector_store %arg10[%c0_20, %c0_21], %24 {strides = array<i32>} : memref<128x128xf32, #tpu.memory_space<vmem>>, vector<128x128xf32>,
    } else {
    }
    %c0 = arith.constant 0 : index
    %c0_2 = arith.constant 0 : index
    %5 = vector.load %arg10[%c0, %c0_2] : memref<128x128xf32, #tpu.memory_space<vmem>>, vector<128x128xf32>
    %c0_3 = arith.constant 0 : index
    %c0_4 = arith.constant 0 : index
    %c0_5 = arith.constant 0 : index
    %6 = vector.load %arg3[%c0_3, %c0_4, %c0_5] : memref<1x128x128xbf16, #tpu.memory_space<vmem>>, vector<1x128x128xbf16>
    %7 = vector.shape_cast %6 : vector<1x128x128xbf16> to vector<128x128xbf16>
    %8 = arith.extf %7 : vector<128x128xbf16> to vector<128x128xf32>
    %c0_6 = arith.constant 0 : index
    %c0_7 = arith.constant 0 : index
    %c0_8 = arith.constant 0 : index
    %9 = vector.load %arg4[%c0_6, %c0_7, %c0_8] : memref<1x128x128xf32, #tpu.memory_space<vmem>>, vector<1x128x128xf32>
    %10 = vector.shape_cast %9 : vector<1x128x128xf32> to vector<128x128xf32>
    %cst = arith.constant dense<0.000000e+00> : vector<128x128xf32>
    %11 = tpu.matmul %8, %10, %cst {dimension_numbers = #tpu.dot_dimension_numbers<[1], [0], [0], [1], [0, 0, 1, 1], [], []>} : vector<128x128xf32>, vector<128x128xf32>, vector<128x128xf32> -> vector<128x128xf32>
    %12 = arith.addf %5, %11 : vector<128x128xf32>
    %c0_9 = arith.constant 0 : index
    %c0_10 = arith.constant 0 : index
    %13 = vector.load %arg10[%c0_9, %c0_10] : memref<128x128xf32, #tpu.memory_space<vmem>>, vector<128x128xf32>
    tpu.vector_store %arg10[%c0_9, %c0_10], %12 {strides = array<i32>} : memref<128x128xf32, #tpu.memory_space<vmem>>, vector<128x128xf32>,
    %c2_i32 = arith.constant 2 : i32
    %14 = arith.cmpi eq, %arg1, %c2_i32 : i32
    %c0_i32_11 = arith.constant 0 : i32
    %15 = arith.cmpi eq, %arg2, %c0_i32_11 : i32
    %16 = arith.andi %14, %15 : i1
    %17 = arith.extui %16 : i1 to i32
    %c0_i32_12 = arith.constant 0 : i32
    %18 = arith.cmpi ne, %17, %c0_i32_12 : i32
    scf.if %18 {
      %c0_13 = arith.constant 0 : index
      %c0_14 = arith.constant 0 : index
      %19 = vector.load %arg9[%c0_13, %c0_14] : memref<128x1xi32, #tpu.memory_space<vmem>>, vector<128x1xi32>
      %c-1_i32 = arith.constant -1 : i32
      %20 = vector.broadcast %c-1_i32 : i32 to vector<128x1xi32>
      %21 = arith.cmpi ne, %19, %20 : vector<128x1xi32>
      %c0_15 = arith.constant 0 : index
      %c0_16 = arith.constant 0 : index
      %22 = vector.load %arg8[%c0_15, %c0_16] : memref<128x128xf32, #tpu.memory_space<vmem>>, vector<128x128xf32>
      %c0_17 = arith.constant 0 : index
      %c0_18 = arith.constant 0 : index
      %23 = vector.load %arg10[%c0_17, %c0_18] : memref<128x128xf32, #tpu.memory_space<vmem>>, vector<128x128xf32>
      %24 = vector.shape_cast %21 : vector<128x1xi1> to vector<128x1xi1>
      %25 = vector.broadcast %24 : vector<128x1xi1> to vector<128x128xi1>
      %26 = arith.select %25, %22, %23 : vector<128x128xi1>, vector<128x128xf32>
      %c0_19 = arith.constant 0 : index
      %c0_20 = arith.constant 0 : index
      %27 = vector.load %arg10[%c0_19, %c0_20] : memref<128x128xf32, #tpu.memory_space<vmem>>, vector<128x128xf32>
      tpu.vector_store %arg10[%c0_19, %c0_20], %26 {strides = array<i32>} : memref<128x128xf32, #tpu.memory_space<vmem>>, vector<128x128xf32>,
    } else {
    }
    return
  }
  func.func @transform_0(%arg0: i32, %arg1: i32, %arg2: i32) -> (i32, i32, i32) {
    %c0_i32 = arith.constant 0 : i32
    return %arg1, %arg0, %arg2 : i32, i32, i32
  }
  func.func @transform_1(%arg0: i32, %arg1: i32, %arg2: i32) -> (i32, i32, i32) {
    %c0_i32 = arith.constant 0 : i32
    %c0_i32_0 = arith.constant 0 : i32
    return %arg1, %arg2, %c0_i32 : i32, i32, i32
  }
  func.func @transform_2(%arg0: i32, %arg1: i32, %arg2: i32) -> (i32, i32) {
    %c0_i32 = arith.constant 0 : i32
    %c0_i32_0 = arith.constant 0 : i32
    return %arg0, %c0_i32 : i32, i32
  }
  func.func @transform_3(%arg0: i32, %arg1: i32, %arg2: i32) -> (i32, i32) {
    %c0_i32 = arith.constant 0 : i32
    %c0_i32_0 = arith.constant 0 : i32
    %c0_i32_1 = arith.constant 0 : i32
    return %c0_i32, %c0_i32_0 : i32, i32
  }
  func.func @transform_4(%arg0: i32, %arg1: i32, %arg2: i32) -> (i32, i32) {
    %c0_i32 = arith.constant 0 : i32
    %c0_i32_0 = arith.constant 0 : i32
    %c0_i32_1 = arith.constant 0 : i32
    return %c0_i32, %c0_i32_0 : i32, i32
  }
  func.func @transform_5(%arg0: i32, %arg1: i32, %arg2: i32) -> (i32, i32) {
    %c0_i32 = arith.constant 0 : i32
    %c0_i32_0 = arith.constant 0 : i32
    return %arg0, %c0_i32 : i32, i32
  }
  func.func @transform_6(%arg0: i32, %arg1: i32, %arg2: i32) -> (i32, i32) {
    %c0_i32 = arith.constant 0 : i32
    %c0_i32_0 = arith.constant 0 : i32
    return %arg0, %c0_i32 : i32, i32
  }
  func.func @transform_7(%arg0: i32, %arg1: i32, %arg2: i32) -> (i32, i32) {
    %c0_i32 = arith.constant 0 : i32
    %c0_i32_0 = arith.constant 0 : i32
    return %arg0, %c0_i32 : i32, i32
  }
}

</mosaic_0001>

<llo_original>
// kernel: tpu_custom_call.1
$region0: #{tpu_custom_call.1}
  #allocation0 [shape = 'u32[]', space=smem, size = 0x4, offset = 0x4, fixed_abs, tag = 'smem constant byte address 0x4 - core index']
  #allocation1 [shape = 'u32[144,128]{1,0:T(1,128)}', space=vmem, size = 0x12000, scoped, tag = 'internal scratch']
  %s0 = inlined_call_operand.vmem [shape: bf16[3,128,128], index: 0, kind: input, shape index: {}]
  %s1 = inlined_call_operand.hbm [shape: f32[3,128,128], index: 1, kind: input, shape index: {}]
  %s2 = inlined_call_operand.vmem [shape: f32[128,8], index: 2, kind: input, shape index: {}]
  %s3 = inlined_call_operand.vmem [shape: f32[8,128], index: 3, kind: input, shape index: {}]
  %s4 = inlined_call_operand.vmem [shape: f32[1,128], index: 4, kind: input, shape index: {}]
  %s5 = inlined_call_operand.hbm [shape: f32[128,128], index: 5, kind: input, shape index: {}]
  %s6 = inlined_call_operand.vmem [shape: s32[128,1], index: 6, kind: input, shape index: {}]
  %s7 = inlined_call_operand.hbm [shape: f32[128,128], index: 7, kind: output, shape index: {}]
  %s8 = sld [smem:[#allocation0]]
  $region77: #{tpu_custom_call.1} parent=0
    _
  %s10 = ssub.s32 1, %s8
  %s11 = scalar_select 0, %s10, %s8
  $region1: #{tpu_custom_call.1} parent=0
    #allocation2 [shape = 'u8[131072]{0}', space=vmem, size = 0x20000, scoped, tag = 'input window, operand 1']
    #allocation3 [shape = 's32[2]{0}', space=sflag, size = 0x8, scoped, tag = 'scoped memory for tpu_custom_call.1']
    #allocation4 [shape = 's32[2]{0}', space=sflag, size = 0x8, scoped, tag = 'scoped memory for tpu_custom_call.1']
    #allocation5 [shape = 'u8[65536]{0}', space=vmem, size = 0x10000, scoped, tag = 'input window, operand 5, single buffered']
    #allocation6 [shape = 's32[1]{0}', space=sflag, size = 0x4, scoped, tag = 'scoped memory for tpu_custom_call.1']
    #allocation7 [shape = 'u8[65536]{0}', space=vmem, size = 0x10000, scoped, tag = 'output window, operand 0, single buffered']
    %12 = vsyncpa [#allocation3], 0
    %s13 = scalar_lea.sflag [#allocation3], 1
    %14 = vsyncpa %s13, 0
    %15 = vsyncpa [#allocation6], 0
    %16 = vsyncpa [#allocation4], 0
    loop: start=0, step=1, limit=5
    $region2: #{tpu_custom_call.1} parent=1 // loop_pre_header
      _
    $region3: #{tpu_custom_call.1} parent=1 // loop_header
      %s18 = sphi 0, %s22
      %p19 = scmp.ge.s32.totalorder %s18, 5
      %s25 = sphi 0, %s44
      %s26 = sphi 0, %s40
      %s27 = sphi 0, %s36
      %s28 = sphi 0, %s25
      %s29 = sphi 0, %s26
      %s30 = sphi 0, %s27
      %s31 = sphi 0, %s28
      %s32 = sphi 0, %s29
      %s33 = sphi 0, %s30
      %s51 = sphi 0, %s53
      %s54 = sphi 0, %s51
      %s55 = sphi 0, %s54
      %s71 = sphi 0, %s55
      %s79 = sphi 0, %s81
      %s82 = sphi 0, %s79
      %s83 = sphi 0, %s82
      %s99 = sphi 0, %s83
      %s105 = sphi 0, %s107
      %s108 = sphi 0, %s105
      %s109 = sphi 0, %s108
      %s125 = sphi 0, %s109
      %s129 = sphi 0, %s129
      %s131 = sphi 0, %s129
      %s132 = sphi 0, %s131
      %s146 = sphi 0, %s132
      %s150 = sphi 0, %s150
      %s152 = sphi 0, %s150
      %s153 = sphi 0, %s152
      %s167 = sphi 0, %s153
      %s173 = sphi 0, %s175
      %s176 = sphi 0, %s173
      %s177 = sphi 0, %s176
      %s193 = sphi 0, %s177
      %s199 = sphi 0, %s201
      %s202 = sphi 0, %s199
      %s203 = sphi 0, %s202
      %s219 = sphi 0, %s203
      %s225 = sphi 0, %s227
      %s228 = sphi 0, %s225
      %s229 = sphi 0, %s228
      %s245 = sphi 0, %s229
    $region4: #{tpu_custom_call.1} parent=1 // loop_header_branch
      %21 = sbr.rel (%p19) target = $region8
    $region5: #{tpu_custom_call.1} parent=1 // loop_body
      %s23 = ssub.s32 %s18, 1
      %s24 = ssub.s32 %s18, 2
      %s34 = sadd.s32 1, %s27
      %p35 = scmp.ge.s32.totalorder %s34, 1
      %s36 = scalar_select %p35, 0, %s34
      %s37 = sadd.s32 1, %s26
      %s38 = scalar_select %p35, %s37, %s26
      %p39 = scmp.ge.s32.totalorder %s38, 3
      %s40 = scalar_select %p39, 0, %s38
      %s41 = sadd.s32 1, %s25
      %s42 = scalar_select %p39, %s41, %s25
      %p43 = scmp.ge.s32.totalorder %s42, 1
      %s44 = scalar_select %p43, 0, %s42
      %s45 = ssub.s32 %s26, %s40
      %s46 = ssub.s32 %s25, %s44
      %s47 = sor.u32 %s45, %s46
      %s48 = ssub.s32 %s27, %s36
      %s49 = sor.u32 %s47, %s48
      %p50 = scmp.eq.s32.totalorder %s49, 0
      %s52 = sadd.s32 %s51, 1
      %s53 = scalar_select %p50, %s51, %s52
      %p56 = pneg %p50
      %p57 = scmp.eq.s32.totalorder %s18, 2
      %p58 = por %p56, %p57
      %p59 = scmp.ne.s32.totalorder %s51, %s54
      %p60 = scmp.eq.s32.totalorder %s18, 0
      %p61 = por %p59, %p60
      %p62 = scmp.ne.s32.totalorder %s51, %s54
      %p63 = scmp.eq.s32.totalorder %s23, 2
      %p64 = por %p62, %p63
      %p65 = scmp.ne.s32.totalorder %s54, %s55
      %p66 = scmp.eq.s32.totalorder %s23, 0
      %p67 = por %p65, %p66
      %p68 = scmp.ne.s32.totalorder %s54, %s55
      %p69 = scmp.eq.s32.totalorder %s24, 2
      %p70 = por %p68, %p69
      %p72 = scmp.ne.s32.totalorder %s55, %s71
      %p73 = scmp.eq.s32.totalorder %s24, 0
      %p74 = por %p72, %p73
      %s75 = ssub.s32 %s26, %s40
      %s76 = ssub.s32 %s27, %s36
      %s77 = sor.u32 %s75, %s76
      %p78 = scmp.eq.s32.totalorder %s77, 0
      %s80 = sadd.s32 %s79, 1
      %s81 = scalar_select %p78, %s79, %s80
      %p84 = pneg %p78
      %p85 = scmp.eq.s32.totalorder %s18, 2
      %p86 = por %p84, %p85
      %p87 = scmp.ne.s32.totalorder %s79, %s82
      %p88 = scmp.eq.s32.totalorder %s18, 0
      %p89 = por %p87, %p88
      %p90 = scmp.ne.s32.totalorder %s79, %s82
      %p91 = scmp.eq.s32.totalorder %s23, 2
      %p92 = por %p90, %p91
      %p93 = scmp.ne.s32.totalorder %s82, %s83
      %p94 = scmp.eq.s32.totalorder %s23, 0
      %p95 = por %p93, %p94
      %p96 = scmp.ne.s32.totalorder %s82, %s83
      %p97 = scmp.eq.s32.totalorder %s24, 2
      %p98 = por %p96, %p97
      %p100 = scmp.ne.s32.totalorder %s83, %s99
      %p101 = scmp.eq.s32.totalorder %s24, 0
      %p102 = por %p100, %p101
      %s103 = ssub.s32 %s25, %s44
      %p104 = scmp.eq.s32.totalorder %s103, 0
      %s106 = sadd.s32 %s105, 1
      %s107 = scalar_select %p104, %s105, %s106
      %p110 = pneg %p104
      %p111 = scmp.eq.s32.totalorder %s18, 2
      %p112 = por %p110, %p111
      %p113 = scmp.ne.s32.totalorder %s105, %s108
      %p114 = scmp.eq.s32.totalorder %s18, 0
      %p115 = por %p113, %p114
      %p116 = scmp.ne.s32.totalorder %s105, %s108
      %p117 = scmp.eq.s32.totalorder %s23, 2
      %p118 = por %p116, %p117
      %p119 = scmp.ne.s32.totalorder %s108, %s109
      %p120 = scmp.eq.s32.totalorder %s23, 0
      %p121 = por %p119, %p120
      %p122 = scmp.ne.s32.totalorder %s108, %s109
      %p123 = scmp.eq.s32.totalorder %s24, 2
      %p124 = por %p122, %p123
      %p126 = scmp.ne.s32.totalorder %s109, %s125
      %p127 = scmp.eq.s32.totalorder %s24, 0
      %p128 = por %p126, %p127
      %s130 = sadd.s32 %s129, 1
      %p133 = scmp.eq.s32.totalorder %s18, 2
      %p134 = scmp.ne.s32.totalorder %s129, %s131
      %p135 = scmp.eq.s32.totalorder %s18, 0
      %p136 = por %p134, %p135
      %p137 = scmp.ne.s32.totalorder %s129, %s131
      %p138 = scmp.eq.s32.totalorder %s23, 2
      %p139 = por %p137, %p138
      %p140 = scmp.ne.s32.totalorder %s131, %s132
      %p141 = scmp.eq.s32.totalorder %s23, 0
      %p142 = por %p140, %p141
      %p143 = scmp.ne.s32.totalorder %s131, %s132
      %p144 = scmp.eq.s32.totalorder %s24, 2
      %p145 = por %p143, %p144
      %p147 = scmp.ne.s32.totalorder %s132, %s146
      %p148 = scmp.eq.s32.totalorder %s24, 0
      %p149 = por %p147, %p148
      %s151 = sadd.s32 %s150, 1
      %p154 = scmp.eq.s32.totalorder %s18, 2
      %p155 = scmp.ne.s32.totalorder %s150, %s152
      %p156 = scmp.eq.s32.totalorder %s18, 0
      %p157 = por %p155, %p156
      %p158 = scmp.ne.s32.totalorder %s150, %s152
      %p159 = scmp.eq.s32.totalorder %s23, 2
      %p160 = por %p158, %p159
      %p161 = scmp.ne.s32.totalorder %s152, %s153
      %p162 = scmp.eq.s32.totalorder %s23, 0
      %p163 = por %p161, %p162
      %p164 = scmp.ne.s32.totalorder %s152, %s153
      %p165 = scmp.eq.s32.totalorder %s24, 2
      %p166 = por %p164, %p165
      %p168 = scmp.ne.s32.totalorder %s153, %s167
      %p169 = scmp.eq.s32.totalorder %s24, 0
      %p170 = por %p168, %p169
      %s171 = ssub.s32 %s25, %s44
      %p172 = scmp.eq.s32.totalorder %s171, 0
      %s174 = sadd.s32 %s173, 1
      %s175 = scalar_select %p172, %s173, %s174
      %p178 = pneg %p172
      %p179 = scmp.eq.s32.totalorder %s18, 2
      %p180 = por %p178, %p179
      %p181 = scmp.ne.s32.totalorder %s173, %s176
      %p182 = scmp.eq.s32.totalorder %s18, 0
      %p183 = por %p181, %p182
      %p184 = scmp.ne.s32.totalorder %s173, %s176
      %p185 = scmp.eq.s32.totalorder %s23, 2
      %p186 = por %p184, %p185
      %p187 = scmp.ne.s32.totalorder %s176, %s177
      %p188 = scmp.eq.s32.totalorder %s23, 0
      %p189 = por %p187, %p188
      %p190 = scmp.ne.s32.totalorder %s176, %s177
      %p191 = scmp.eq.s32.totalorder %s24, 2
      %p192 = por %p190, %p191
      %p194 = scmp.ne.s32.totalorder %s177, %s193
      %p195 = scmp.eq.s32.totalorder %s24, 0
      %p196 = por %p194, %p195
      %s197 = ssub.s32 %s25, %s44
      %p198 = scmp.eq.s32.totalorder %s197, 0
      %s200 = sadd.s32 %s199, 1
      %s201 = scalar_select %p198, %s199, %s200
      %p204 = pneg %p198
      %p205 = scmp.eq.s32.totalorder %s18, 2
      %p206 = por %p204, %p205
      %p207 = scmp.ne.s32.totalorder %s199, %s202
      %p208 = scmp.eq.s32.totalorder %s18, 0
      %p209 = por %p207, %p208
      %p210 = scmp.ne.s32.totalorder %s199, %s202
      %p211 = scmp.eq.s32.totalorder %s23, 2
      %p212 = por %p210, %p211
      %p213 = scmp.ne.s32.totalorder %s202, %s203
      %p214 = scmp.eq.s32.totalorder %s23, 0
      %p215 = por %p213, %p214
      %p216 = scmp.ne.s32.totalorder %s202, %s203
      %p217 = scmp.eq.s32.totalorder %s24, 2
      %p218 = por %p216, %p217
      %p220 = scmp.ne.s32.totalorder %s203, %s219
      %p221 = scmp.eq.s32.totalorder %s24, 0
      %p222 = por %p220, %p221
      %s223 = ssub.s32 %s25, %s44
      %p224 = scmp.eq.s32.totalorder %s223, 0
      %s226 = sadd.s32 %s225, 1
      %s227 = scalar_select %p224, %s225, %s226
      %p230 = pneg %p224
      %p231 = scmp.eq.s32.totalorder %s18, 2
      %p232 = por %p230, %p231
      %p233 = scmp.ne.s32.totalorder %s225, %s228
      %p234 = scmp.eq.s32.totalorder %s18, 0
      %p235 = por %p233, %p234
      %p236 = scmp.ne.s32.totalorder %s225, %s228
      %p237 = scmp.eq.s32.totalorder %s23, 2
      %p238 = por %p236, %p237
      %p239 = scmp.ne.s32.totalorder %s228, %s229
      %p240 = scmp.eq.s32.totalorder %s23, 0
      %p241 = por %p239, %p240
      %p242 = scmp.ne.s32.totalorder %s228, %s229
      %p243 = scmp.eq.s32.totalorder %s24, 2
      %p244 = por %p242, %p243
      %p246 = scmp.ne.s32.totalorder %s229, %s245
      %p247 = scmp.eq.s32.totalorder %s24, 0
      %p248 = por %p246, %p247
      %p249 = scmp.le.s32.totalorder 1, %s18
      %p250 = scmp.lt.s32.totalorder %s18, 4
      %p251 = pnand %p249, %p250
      %p252 = pneg %p251
      // Predicated region
      $region9: #{tpu_custom_call.1} parent=5 // pred_check
        _
      $region10: #{tpu_custom_call.1} parent=5 // pred_check_branch
        %254 = sbr.rel (%p251) target = $region12
      $region11: #{tpu_custom_call.1} parent=5 // pred_region
        %s255 = ssub.s32 %s18, 1
        // Predicated region
        $region13: #{tpu_custom_call.1} parent=11 // pred_check
          %p256 = pneg %p121
        $region14: #{tpu_custom_call.1} parent=11 // pred_check_branch
          %258 = sbr.rel (%p256) target = $region16
        $region15: #{tpu_custom_call.1} parent=11 // pred_region
          %s259 = smul.u32 16, %s28
          %p260 = scmp.lt.s32.totalorder %s259, 15
          %s261 = scalar_select %p260, %s259, 15
          %s262 = smul.addr %s261, 8
          %s263 = scalar_lea.vmem %s2, %s262
          %s264 = smul.u32 16, %s28
        $region16: #{tpu_custom_call.1} parent=11 // pred_fallthru
          _
        // Predicated region
        $region17: #{tpu_custom_call.1} parent=11 // pred_check
          %p265 = pneg %p142
        $region18: #{tpu_custom_call.1} parent=11 // pred_check_branch
          %267 = sbr.rel (%p265) target = $region20
        $region19: #{tpu_custom_call.1} parent=11 // pred_region
          _
        $region20: #{tpu_custom_call.1} parent=11 // pred_fallthru
          _
        // Predicated region
        $region21: #{tpu_custom_call.1} parent=11 // pred_check
          %p268 = pneg %p163
        $region22: #{tpu_custom_call.1} parent=11 // pred_check_branch
          %270 = sbr.rel (%p268) target = $region24
        $region23: #{tpu_custom_call.1} parent=11 // pred_region
          _
        $region24: #{tpu_custom_call.1} parent=11 // pred_fallthru
          _
        // Predicated region
        $region25: #{tpu_custom_call.1} parent=11 // pred_check
          %p271 = pneg %p189
        $region26: #{tpu_custom_call.1} parent=11 // pred_check_branch
          %273 = sbr.rel (%p271) target = $region28
        $region27: #{tpu_custom_call.1} parent=11 // pred_region
          %s274 = smul.u32 16, %s28
          %s276 = ssub.s32 2048, 2048
          %277 = vsyncadd [#allocation6], %s276
          %s278 = smul.addr %s274, 128
          %s279 = scalar_lea.hbm %s5, %s278
          %s280 = sshll.u32 [#allocation5], 4
          %s281 = int_to_ptr.vmem [resolvable:$true] %s280
          %286 = dma.hbm_to_vmem [thread:$0]  %s279, 2048, %s281, [#allocation6], 128, 128, 8
        $region28: #{tpu_custom_call.1} parent=11 // pred_fallthru
          _
        // Predicated region
        $region29: #{tpu_custom_call.1} parent=11 // pred_check
          %p287 = pneg %p215
        $region30: #{tpu_custom_call.1} parent=11 // pred_check_branch
          %289 = sbr.rel (%p287) target = $region32
        $region31: #{tpu_custom_call.1} parent=11 // pred_region
          %s290 = smul.u32 16, %s28
          %p291 = scmp.lt.s32.totalorder %s290, 15
          %s292 = scalar_select %p291, %s290, 15
          %s293 = smul.addr %s292, 8
          %s294 = scalar_lea.vmem %s6, %s293
          %s295 = smul.u32 16, %s28
        $region32: #{tpu_custom_call.1} parent=11 // pred_fallthru
          _
      $region12: #{tpu_custom_call.1} parent=5 // pred_fallthru
        _
      %p296 = scmp.lt.s32.totalorder %s18, 3
      // Predicated region
      $region33: #{tpu_custom_call.1} parent=5 // pred_check
        %p297 = pneg %p296
      $region34: #{tpu_custom_call.1} parent=5 // pred_check_branch
        %299 = sbr.rel (%p297) target = $region36
      $region35: #{tpu_custom_call.1} parent=5 // pred_region
        // Predicated region
        $region37: #{tpu_custom_call.1} parent=35 // pred_check
          %p300 = pneg %p61
        $region38: #{tpu_custom_call.1} parent=35 // pred_check_branch
          %302 = sbr.rel (%p300) target = $region40
        $region39: #{tpu_custom_call.1} parent=35 // pred_region
          %s303 = smul.u32 16, %s25
          %p304 = scmp.lt.s32.totalorder %s26, 2
          %s305 = scalar_select %p304, %s26, 2
          %p306 = scmp.lt.s32.totalorder %s303, 15
          %s307 = scalar_select %p306, %s303, 15
          %p308 = scmp.lt.s32.totalorder %s27, 0
          %s309 = scalar_select %p308, %s27, 0
          %s310 = sadd.s32 %s309, %s307
          %s311 = smul.addr %s305, 16
          %s312 = sadd.s32 %s310, %s311
          %s313 = smul.addr %s312, 4
          %s314 = scalar_lea.vmem %s0, %s313
          %s315 = smul.u32 16, %s25
        $region40: #{tpu_custom_call.1} parent=35 // pred_fallthru
          _
        // Predicated region
        $region41: #{tpu_custom_call.1} parent=35 // pred_check
          %p316 = pneg %p89
        $region42: #{tpu_custom_call.1} parent=35 // pred_check_branch
          %318 = sbr.rel (%p316) target = $region44
        $region43: #{tpu_custom_call.1} parent=35 // pred_region
          %s319 = sand.u32 %s79, 1
          %s320 = scalar_lea.sflag [#allocation3], %s319
          %s321 = sand.u32 %s79, 1
          %s322 = smul.addr %s321, 128
          %s323 = scalar_lea.vmem [#allocation2], %s322
          %s324 = smul.u32 16, %s27
          %s326 = ssub.s32 2048, 2048
          %327 = vsyncadd %s320, %s326
          %s328 = smul.addr %s26, 16
          %s329 = sadd.s32 %s324, %s328
          %s330 = smul.addr %s329, 128
          %s331 = scalar_lea.hbm %s1, %s330
          %s332 = sshll.u32 %s323, 4
          %s333 = int_to_ptr.vmem [resolvable:$true] %s332
          %338 = dma.hbm_to_vmem [thread:$0]  %s331, 2048, %s333, %s320, 128, 128, 8
        $region44: #{tpu_custom_call.1} parent=35 // pred_fallthru
          _
      $region36: #{tpu_custom_call.1} parent=5 // pred_fallthru
        _
      %p339 = scmp.le.s32.totalorder 1, %s18
      %p340 = scmp.lt.s32.totalorder %s18, 4
      %p341 = pnand %p339, %p340
      %p342 = pneg %p341
      // Predicated region
      $region45: #{tpu_custom_call.1} parent=5 // pred_check
        _
      $region46: #{tpu_custom_call.1} parent=5 // pred_check_branch
        %344 = sbr.rel (%p341) target = $region48
      $region47: #{tpu_custom_call.1} parent=5 // pred_region
        %s345 = ssub.s32 %s18, 1
        %s346 = sand.u32 %s82, 1
        %s347 = scalar_lea.sflag [#allocation3], %s346
        %s348 = sand.u32 %s82, 1
        %s349 = smul.addr %s348, 128
        %s350 = scalar_lea.vmem [#allocation2], %s349
        // Predicated region
        $region49: #{tpu_custom_call.1} parent=47 // pred_check
          %p351 = pneg %p95
        $region50: #{tpu_custom_call.1} parent=47 // pred_check_branch
          %353 = sbr.rel (%p351) target = $region52
        $region51: #{tpu_custom_call.1} parent=47 // pred_region
          %354 = dma.done %s347, 2048
        $region52: #{tpu_custom_call.1} parent=47 // pred_fallthru
          _
        // Predicated region
        $region53: #{tpu_custom_call.1} parent=47 // pred_check
          %p355 = pneg %p189
        $region54: #{tpu_custom_call.1} parent=47 // pred_check_branch
          %357 = sbr.rel (%p355) target = $region56
        $region55: #{tpu_custom_call.1} parent=47 // pred_region
          %358 = dma.done [#allocation6], 2048
        $region56: #{tpu_custom_call.1} parent=47 // pred_fallthru
          _
        %s359 = smul.u32 16, %s28
        %p360 = scmp.lt.s32.totalorder %s29, 2
        %s361 = scalar_select %p360, %s29, 2
        %p362 = scmp.lt.s32.totalorder %s359, 15
        %s363 = scalar_select %p362, %s359, 15
        %p364 = scmp.lt.s32.totalorder %s30, 0
        %s365 = scalar_select %p364, %s30, 0
        %s366 = sadd.s32 %s365, %s363
        %s367 = smul.addr %s361, 16
        %s368 = sadd.s32 %s366, %s367
        %s369 = smul.addr %s368, 4
        %s370 = scalar_lea.vmem %s0, %s369
        %p371 = pneg %p67
        %p372 = pneg %p64
        %s373 = sand.u32 %s82, 1
        %s374 = scalar_lea.sflag [#allocation3], %s373
        %s375 = sand.u32 %s82, 1
        %s376 = smul.addr %s375, 128
        %s377 = scalar_lea.vmem [#allocation2], %s376
        %p378 = pneg %p95
        %p379 = pneg %p92
        %s380 = smul.u32 16, %s28
        %p381 = scmp.lt.s32.totalorder %s380, 15
        %s382 = scalar_select %p381, %s380, 15
        %s383 = smul.addr %s382, 8
        %s384 = scalar_lea.vmem %s2, %s383
        %p385 = pneg %p121
        %p386 = pneg %p118
        %p387 = pneg %p142
        %p388 = pneg %p139
        %p389 = pneg %p163
        %p390 = pneg %p160
        %p391 = pneg %p189
        %p392 = pneg %p186
        %s393 = smul.u32 16, %s28
        %p394 = scmp.lt.s32.totalorder %s393, 15
        %s395 = scalar_select %p394, %s393, 15
        %s396 = smul.addr %s395, 8
        %s397 = scalar_lea.vmem %s6, %s396
        %p398 = pneg %p215
        %p399 = pneg %p212
        %p400 = pneg %p241
        %p401 = pneg %p238
        %s402 = smul.u32 16, %s28
        %p403 = scmp.lt.s32.totalorder %s29, 2
        %s404 = scalar_select %p403, %s29, 2
        %p405 = scmp.lt.s32.totalorder %s402, 15
        %s406 = scalar_select %p405, %s402, 15
        %p407 = scmp.lt.s32.totalorder %s30, 0
        %s408 = scalar_select %p407, %s30, 0
        %s409 = sadd.s32 %s408, %s406
        %s410 = smul.addr %s404, 16
        %s411 = sadd.s32 %s409, %s410
        %s412 = smul.addr %s411, 4
        %s413 = scalar_lea.vmem %s0, %s412
        %s414 = smul.u32 16, %s28
        %s415 = smul.u32 16, %s30
        %s416 = smul.u32 16, %s28
        %p417 = scmp.lt.s32.totalorder %s416, 15
        %s418 = scalar_select %p417, %s416, 15
        %s419 = smul.addr %s418, 8
        %s420 = scalar_lea.vmem %s2, %s419
        %s421 = smul.u32 16, %s28
        %s422 = smul.u32 16, %s28
        %s423 = smul.u32 16, %s28
        %p424 = scmp.lt.s32.totalorder %s423, 15
        %s425 = scalar_select %p424, %s423, 15
        %s426 = smul.addr %s425, 8
        %s427 = scalar_lea.vmem %s6, %s426
        %s428 = smul.u32 16, %s28
        %s429 = smul.u32 16, %s28
        %p430 = scmp.eq.s32.totalorder %s29, 0
        %p431 = scmp.eq.s32.totalorder %s30, 0
        %p432 = pnand %p430, %p431
        %p433 = pneg %p432
        // Predicated region
        $region57: #{tpu_custom_call.1} parent=47 // pred_check
          _
        $region58: #{tpu_custom_call.1} parent=47 // pred_check_branch
          %435 = sbr.rel (%p432) target = $region60
        $region59: #{tpu_custom_call.1} parent=47 // pred_region
          %v436 = vld [vmem:[%s420] sm:$0xff]
          %v437 = vld [vmem:[%s420 + $0x8] sm:$0xff]
          %v438 = vld [vmem:[%s420 + $0x10] sm:$0xff]
          %v439 = vld [vmem:[%s420 + $0x18] sm:$0xff]
          %v440 = vld [vmem:[%s420 + $0x20] sm:$0xff]
          %v441 = vld [vmem:[%s420 + $0x28] sm:$0xff]
          %v442 = vld [vmem:[%s420 + $0x30] sm:$0xff]
          %v443 = vld [vmem:[%s420 + $0x38] sm:$0xff]
          %v444 = vld [vmem:[%s420 + $0x40] sm:$0xff]
          %v445 = vld [vmem:[%s420 + $0x48] sm:$0xff]
          %v446 = vld [vmem:[%s420 + $0x50] sm:$0xff]
          %v447 = vld [vmem:[%s420 + $0x58] sm:$0xff]
          %v448 = vld [vmem:[%s420 + $0x60] sm:$0xff]
          %v449 = vld [vmem:[%s420 + $0x68] sm:$0xff]
          %v450 = vld [vmem:[%s420 + $0x70] sm:$0xff]
          %v451 = vld [vmem:[%s420 + $0x78] sm:$0xff]
          %v452 = vld [vmem:[%s3] sm:$0xff]
          %v453 = vld [vmem:[%s4] sm:$0x1]
          %v455 = vlaneseq
          %v456 = vshrl.u32 %v455, 7
          %v457 = vsub.s32 0, %v456
          %v458 = vrot.slane %v453, %v457
          %vm460 = vcmask 64512
          %v462 = vsel %vm460, %v436, 0
          %v465 = vsel %vm460, %v437, 0
          %v468 = vsel %vm460, %v438, 0
          %v471 = vsel %vm460, %v439, 0
          %v474 = vsel %vm460, %v440, 0
          %v477 = vsel %vm460, %v441, 0
          %v480 = vsel %vm460, %v442, 0
          %v483 = vsel %vm460, %v443, 0
          %v486 = vsel %vm460, %v444, 0
          %v489 = vsel %vm460, %v445, 0
          %v492 = vsel %vm460, %v446, 0
          %v495 = vsel %vm460, %v447, 0
          %v498 = vsel %vm460, %v448, 0
          %v501 = vsel %vm460, %v449, 0
          %v504 = vsel %vm460, %v450, 0
          %v507 = vsel %vm460, %v451, 0
          %509 = vmatprep.subr.mxu0 0.0
          %510 = vmatpush1.msra.mxu0 %v452
          %511 = vmatprep.subr.mxu0 0.0
          %512 = vmatpush1.msra.mxu0 0.0
          %513 = vmatprep.subr.mxu0 0.0
          %514 = vmatpush1.msra.mxu0 0.0
          %515 = vmatprep.subr.mxu0 0.0
          %516 = vmatpush1.msra.mxu0 0.0
          %517 = vmatprep.subr.mxu0 0.0
          %518 = vmatpush1.msra.mxu0 0.0
          %519 = vmatprep.subr.mxu0 0.0
          %520 = vmatpush1.msra.mxu0 0.0
          %521 = vmatprep.subr.mxu0 0.0
          %522 = vmatpush1.msra.mxu0 0.0
          %523 = vmatprep.subr.mxu0 0.0
          %524 = vmatpush1.msra.mxu0 0.0
          %525 = vmatprep.subr.mxu0 0.0
          %526 = vmatpush1.msra.mxu0 0.0
          %527 = vmatprep.subr.mxu0 0.0
          %528 = vmatpush1.msra.mxu0 0.0
          %529 = vmatprep.subr.mxu0 0.0
          %530 = vmatpush1.msra.mxu0 0.0
          %531 = vmatprep.subr.mxu0 0.0
          %532 = vmatpush1.msra.mxu0 0.0
          %533 = vmatprep.subr.mxu0 0.0
          %534 = vmatpush1.msra.mxu0 0.0
          %535 = vmatprep.subr.mxu0 0.0
          %536 = vmatpush1.msra.mxu0 0.0
          %537 = vmatprep.subr.mxu0 0.0
          %538 = vmatpush1.msra.mxu0 0.0
          %539 = vmatprep.subr.mxu0 0.0
          %540 = vmatpush1.msra.mxu0 0.0
          %541 = vmatprep.subr.mxu0 0.0
          %542 = vmatpush1.msra.mxu0 0.0
          %543 = vmatprep.subr.mxu0 0.0
          %544 = vmatpush1.msra.mxu0 0.0
          %545 = vmatprep.subr.mxu0 0.0
          %546 = vmatpush1.msra.mxu0 0.0
          %547 = vmatprep.subr.mxu0 0.0
          %548 = vmatpush1.msra.mxu0 0.0
          %549 = vmatprep.subr.mxu0 0.0
          %550 = vmatpush1.msra.mxu0 0.0
          %551 = vmatprep.subr.mxu0 0.0
          %552 = vmatpush1.msra.mxu0 0.0
          %553 = vmatprep.subr.mxu0 0.0
          %554 = vmatpush1.msra.mxu0 0.0
          %555 = vmatprep.subr.mxu0 0.0
          %556 = vmatpush1.msra.mxu0 0.0
          %557 = vmatprep.subr.mxu0 0.0
          %558 = vmatpush1.msra.mxu0 0.0
          %559 = vmatprep.subr.mxu0 0.0
          %560 = vmatpush1.msra.mxu0 0.0
          %561 = vmatprep.subr.mxu0 0.0
          %562 = vmatpush1.msra.mxu0 0.0
          %563 = vmatprep.subr.mxu0 0.0
          %564 = vmatpush1.msra.mxu0 0.0
          %565 = vmatprep.subr.mxu0 0.0
          %566 = vmatpush1.msra.mxu0 0.0
          %567 = vmatprep.subr.mxu0 0.0
          %568 = vmatpush1.msra.mxu0 0.0
          %569 = vmatprep.subr.mxu0 0.0
          %570 = vmatpush1.msra.mxu0 0.0
          %571 = vmatprep.subr.mxu0 0.0
          %572 = vmatpush1.msra.mxu0 0.0
          %573 = vmatprep.mubr.f32.mxu0 0.0
          %574 = vmatmul.mubr.f32.gmra.mrb[0].mxu0 %v462
          %v575 = vpop.f32.mrb[0].mxu0
          %v576 = vadd.f32 %v458, %v575
          %v577 = vpop.f32.mrb[0].mxu0
          %578 = vmatprep.mubr.f32.mxu0 0.0
          %579 = vmatmul.mubr.f32.gmra.mrb[0].mxu0 %v465
          %v580 = vpop.f32.mrb[0].mxu0
          %v581 = vadd.f32 %v458, %v580
          %v582 = vpop.f32.mrb[0].mxu0
          %583 = vmatprep.mubr.f32.mxu0 0.0
          %584 = vmatmul.mubr.f32.gmra.mrb[0].mxu0 %v468
          %v585 = vpop.f32.mrb[0].mxu0
          %v586 = vadd.f32 %v458, %v585
          %v587 = vpop.f32.mrb[0].mxu0
          %588 = vmatprep.mubr.f32.mxu0 0.0
          %589 = vmatmul.mubr.f32.gmra.mrb[0].mxu0 %v471
          %v590 = vpop.f32.mrb[0].mxu0
          %v591 = vadd.f32 %v458, %v590
          %v592 = vpop.f32.mrb[0].mxu0
          %593 = vmatprep.mubr.f32.mxu0 0.0
          %594 = vmatmul.mubr.f32.gmra.mrb[0].mxu0 %v474
          %v595 = vpop.f32.mrb[0].mxu0
          %v596 = vadd.f32 %v458, %v595
          %v597 = vpop.f32.mrb[0].mxu0
          %598 = vmatprep.mubr.f32.mxu0 0.0
          %599 = vmatmul.mubr.f32.gmra.mrb[0].mxu0 %v477
          %v600 = vpop.f32.mrb[0].mxu0
          %v601 = vadd.f32 %v458, %v600
          %v602 = vpop.f32.mrb[0].mxu0
          %603 = vmatprep.mubr.f32.mxu0 0.0
          %604 = vmatmul.mubr.f32.gmra.mrb[0].mxu0 %v480
          %v605 = vpop.f32.mrb[0].mxu0
          %v606 = vadd.f32 %v458, %v605
          %v607 = vpop.f32.mrb[0].mxu0
          %608 = vmatprep.mubr.f32.mxu0 0.0
          %609 = vmatmul.mubr.f32.gmra.mrb[0].mxu0 %v483
          %v610 = vpop.f32.mrb[0].mxu0
          %v611 = vadd.f32 %v458, %v610
          %v612 = vpop.f32.mrb[0].mxu0
          %613 = vmatprep.mubr.f32.mxu0 0.0
          %614 = vmatmul.mubr.f32.gmra.mrb[0].mxu0 %v486
          %v615 = vpop.f32.mrb[0].mxu0
          %v616 = vadd.f32 %v458, %v615
          %v617 = vpop.f32.mrb[0].mxu0
          %618 = vmatprep.mubr.f32.mxu0 0.0
          %619 = vmatmul.mubr.f32.gmra.mrb[0].mxu0 %v489
          %v620 = vpop.f32.mrb[0].mxu0
          %v621 = vadd.f32 %v458, %v620
          %v622 = vpop.f32.mrb[0].mxu0
          %623 = vmatprep.mubr.f32.mxu0 0.0
          %624 = vmatmul.mubr.f32.gmra.mrb[0].mxu0 %v492
          %v625 = vpop.f32.mrb[0].mxu0
          %v626 = vadd.f32 %v458, %v625
          %v627 = vpop.f32.mrb[0].mxu0
          %628 = vmatprep.mubr.f32.mxu0 0.0
          %629 = vmatmul.mubr.f32.gmra.mrb[0].mxu0 %v495
          %v630 = vpop.f32.mrb[0].mxu0
          %v631 = vadd.f32 %v458, %v630
          %v632 = vpop.f32.mrb[0].mxu0
          %633 = vmatprep.mubr.f32.mxu0 0.0
          %634 = vmatmul.mubr.f32.gmra.mrb[0].mxu0 %v498
          %v635 = vpop.f32.mrb[0].mxu0
          %v636 = vadd.f32 %v458, %v635
          %v637 = vpop.f32.mrb[0].mxu0
          %638 = vmatprep.mubr.f32.mxu0 0.0
          %639 = vmatmul.mubr.f32.gmra.mrb[0].mxu0 %v501
          %v640 = vpop.f32.mrb[0].mxu0
          %v641 = vadd.f32 %v458, %v640
          %v642 = vpop.f32.mrb[0].mxu0
          %643 = vmatprep.mubr.f32.mxu0 0.0
          %644 = vmatmul.mubr.f32.gmra.mrb[0].mxu0 %v504
          %v645 = vpop.f32.mrb[0].mxu0
          %v646 = vadd.f32 %v458, %v645
          %v647 = vpop.f32.mrb[0].mxu0
          %648 = vmatprep.mubr.f32.mxu0 0.0
          %649 = vmatmul.mubr.f32.gmra.mrb[0].mxu0 %v507
          %v650 = vpop.f32.mrb[0].mxu0
          %v651 = vadd.f32 %v458, %v650
          %v652 = vpop.f32.mrb[0].mxu0
          %653 = vdwg.mxu0
          %654 = vst [vmem:[#allocation7] sm:$0xff] %v576
          %655 = vst [vmem:[#allocation7 + $0x8] sm:$0xff] %v581
          %656 = vst [vmem:[#allocation7 + $0x10] sm:$0xff] %v586
          %657 = vst [vmem:[#allocation7 + $0x18] sm:$0xff] %v591
          %658 = vst [vmem:[#allocation7 + $0x20] sm:$0xff] %v596
          %659 = vst [vmem:[#allocation7 + $0x28] sm:$0xff] %v601
          %660 = vst [vmem:[#allocation7 + $0x30] sm:$0xff] %v606
          %661 = vst [vmem:[#allocation7 + $0x38] sm:$0xff] %v611
          %662 = vst [vmem:[#allocation7 + $0x40] sm:$0xff] %v616
          %663 = vst [vmem:[#allocation7 + $0x48] sm:$0xff] %v621
          %664 = vst [vmem:[#allocation7 + $0x50] sm:$0xff] %v626
          %665 = vst [vmem:[#allocation7 + $0x58] sm:$0xff] %v631
          %666 = vst [vmem:[#allocation7 + $0x60] sm:$0xff] %v636
          %667 = vst [vmem:[#allocation7 + $0x68] sm:$0xff] %v641
          %668 = vst [vmem:[#allocation7 + $0x70] sm:$0xff] %v646
          %669 = vst [vmem:[#allocation7 + $0x78] sm:$0xff] %v651
        $region60: #{tpu_custom_call.1} parent=47 // pred_fallthru
          _
        %v670 = vld [vmem:[#allocation7] sm:$0xff]
        %v671 = vld [vmem:[#allocation7 + $0x8] sm:$0xff]
        %v672 = vld [vmem:[#allocation7 + $0x10] sm:$0xff]
        %v673 = vld [vmem:[#allocation7 + $0x18] sm:$0xff]
        %v674 = vld [vmem:[#allocation7 + $0x20] sm:$0xff]
        %v675 = vld [vmem:[#allocation7 + $0x28] sm:$0xff]
        %v676 = vld [vmem:[#allocation7 + $0x30] sm:$0xff]
        %v677 = vld [vmem:[#allocation7 + $0x38] sm:$0xff]
        %v678 = vld [vmem:[#allocation7 + $0x40] sm:$0xff]
        %v679 = vld [vmem:[#allocation7 + $0x48] sm:$0xff]
        %v680 = vld [vmem:[#allocation7 + $0x50] sm:$0xff]
        %v681 = vld [vmem:[#allocation7 + $0x58] sm:$0xff]
        %v682 = vld [vmem:[#allocation7 + $0x60] sm:$0xff]
        %v683 = vld [vmem:[#allocation7 + $0x68] sm:$0xff]
        %v684 = vld [vmem:[#allocation7 + $0x70] sm:$0xff]
        %v685 = vld [vmem:[#allocation7 + $0x78] sm:$0xff]
        %v686 = vld [vmem:[%s413] sm:$0xf]
        %v687 = vld [vmem:[%s413 + $0x4] sm:$0xf]
        %v688 = vld [vmem:[%s413 + $0x8] sm:$0xf]
        %v689 = vld [vmem:[%s413 + $0xc] sm:$0xf]
        %v690 = vld [vmem:[%s413 + $0x10] sm:$0xf]
        %v691 = vld [vmem:[%s413 + $0x14] sm:$0xf]
        %v692 = vld [vmem:[%s413 + $0x18] sm:$0xf]
        %v693 = vld [vmem:[%s413 + $0x1c] sm:$0xf]
        %v694 = vld [vmem:[%s413 + $0x20] sm:$0xf]
        %v695 = vld [vmem:[%s413 + $0x24] sm:$0xf]
        %v696 = vld [vmem:[%s413 + $0x28] sm:$0xf]
        %v697 = vld [vmem:[%s413 + $0x2c] sm:$0xf]
        %v698 = vld [vmem:[%s413 + $0x30] sm:$0xf]
        %v699 = vld [vmem:[%s413 + $0x34] sm:$0xf]
        %v700 = vld [vmem:[%s413 + $0x38] sm:$0xf]
        %v701 = vld [vmem:[%s413 + $0x3c] sm:$0xf]
        %v702 = vunpack.c.l.bf16 %v686
        %v703 = vunpack.c.l.bf16 %v687
        %v704 = vunpack.c.l.bf16 %v688
        %v705 = vunpack.c.l.bf16 %v689
        %v706 = vunpack.c.l.bf16 %v690
        %v707 = vunpack.c.l.bf16 %v691
        %v708 = vunpack.c.l.bf16 %v692
        %v709 = vunpack.c.l.bf16 %v693
        %v710 = vunpack.c.l.bf16 %v694
        %v711 = vunpack.c.l.bf16 %v695
        %v712 = vunpack.c.l.bf16 %v696
        %v713 = vunpack.c.l.bf16 %v697
        %v714 = vunpack.c.l.bf16 %v698
        %v715 = vunpack.c.l.bf16 %v699
        %v716 = vunpack.c.l.bf16 %v700
        %v717 = vunpack.c.l.bf16 %v701
        %v718 = vld [vmem:[%s350] sm:$0xff]
        %v719 = vld [vmem:[%s350 + $0x8] sm:$0xff]
        %v720 = vld [vmem:[%s350 + $0x10] sm:$0xff]
        %v721 = vld [vmem:[%s350 + $0x18] sm:$0xff]
        %v722 = vld [vmem:[%s350 + $0x20] sm:$0xff]
        %v723 = vld [vmem:[%s350 + $0x28] sm:$0xff]
        %v724 = vld [vmem:[%s350 + $0x30] sm:$0xff]
        %v725 = vld [vmem:[%s350 + $0x38] sm:$0xff]
        %v726 = vld [vmem:[%s350 + $0x40] sm:$0xff]
        %v727 = vld [vmem:[%s350 + $0x48] sm:$0xff]
        %v728 = vld [vmem:[%s350 + $0x50] sm:$0xff]
        %v729 = vld [vmem:[%s350 + $0x58] sm:$0xff]
        %v730 = vld [vmem:[%s350 + $0x60] sm:$0xff]
        %v731 = vld [vmem:[%s350 + $0x68] sm:$0xff]
        %v732 = vld [vmem:[%s350 + $0x70] sm:$0xff]
        %v733 = vld [vmem:[%s350 + $0x78] sm:$0xff]
        %734 = vmatprep.subr.mxu0 0.0
        %735 = vmatpush1.msra.mxu0 %v718
        %736 = vmatprep.subr.mxu0 0.0
        %737 = vmatpush1.msra.mxu0 %v719
        %738 = vmatprep.subr.mxu0 0.0
        %739 = vmatpush1.msra.mxu0 %v720
        %740 = vmatprep.subr.mxu0 0.0
        %741 = vmatpush1.msra.mxu0 %v721
        %742 = vmatprep.subr.mxu0 0.0
        %743 = vmatpush1.msra.mxu0 %v722
        %744 = vmatprep.subr.mxu0 0.0
        %745 = vmatpush1.msra.mxu0 %v723
        %746 = vmatprep.subr.mxu0 0.0
        %747 = vmatpush1.msra.mxu0 %v724
        %748 = vmatprep.subr.mxu0 0.0
        %749 = vmatpush1.msra.mxu0 %v725
        %750 = vmatprep.subr.mxu0 0.0
        %751 = vmatpush1.msra.mxu0 %v726
        %752 = vmatprep.subr.mxu0 0.0
        %753 = vmatpush1.msra.mxu0 %v727
        %754 = vmatprep.subr.mxu0 0.0
        %755 = vmatpush1.msra.mxu0 %v728
        %756 = vmatprep.subr.mxu0 0.0
        %757 = vmatpush1.msra.mxu0 %v729
        %758 = vmatprep.subr.mxu0 0.0
        %759 = vmatpush1.msra.mxu0 %v730
        %760 = vmatprep.subr.mxu0 0.0
        %761 = vmatpush1.msra.mxu0 %v731
        %762 = vmatprep.subr.mxu0 0.0
        %763 = vmatpush1.msra.mxu0 %v732
        %764 = vmatprep.subr.mxu0 0.0
        %765 = vmatpush1.msra.mxu0 %v733
        %766 = vmatprep.subr.mxu0 0.0
        %767 = vmatpush1.msra.mxu0 0.0
        %768 = vmatprep.subr.mxu0 0.0
        %769 = vmatpush1.msra.mxu0 0.0
        %770 = vmatprep.subr.mxu0 0.0
        %771 = vmatpush1.msra.mxu0 0.0
        %772 = vmatprep.subr.mxu0 0.0
        %773 = vmatpush1.msra.mxu0 0.0
        %774 = vmatprep.subr.mxu0 0.0
        %775 = vmatpush1.msra.mxu0 0.0
        %776 = vmatprep.subr.mxu0 0.0
        %777 = vmatpush1.msra.mxu0 0.0
        %778 = vmatprep.subr.mxu0 0.0
        %779 = vmatpush1.msra.mxu0 0.0
        %780 = vmatprep.subr.mxu0 0.0
        %781 = vmatpush1.msra.mxu0 0.0
        %782 = vmatprep.subr.mxu0 0.0
        %783 = vmatpush1.msra.mxu0 0.0
        %784 = vmatprep.subr.mxu0 0.0
        %785 = vmatpush1.msra.mxu0 0.0
        %786 = vmatprep.subr.mxu0 0.0
        %787 = vmatpush1.msra.mxu0 0.0
        %788 = vmatprep.subr.mxu0 0.0
        %789 = vmatpush1.msra.mxu0 0.0
        %790 = vmatprep.subr.mxu0 0.0
        %791 = vmatpush1.msra.mxu0 0.0
        %792 = vmatprep.subr.mxu0 0.0
        %793 = vmatpush1.msra.mxu0 0.0
        %794 = vmatprep.subr.mxu0 0.0
        %795 = vmatpush1.msra.mxu0 0.0
        %796 = vmatprep.subr.mxu0 0.0
        %797 = vmatpush1.msra.mxu0 0.0
        %798 = vmatprep.mubr.f32.mxu0 0.0
        %799 = vmatmul.mubr.f32.gmra.mrb[0].mxu0 %v702
        %v800 = vpop.f32.mrb[0].mxu0
        %v801 = vadd.f32 0.0, %v800
        %v802 = vpop.f32.mrb[0].mxu0
        %803 = vmatprep.mubr.f32.mxu0 0.0
        %804 = vmatmul.mubr.f32.gmra.mrb[0].mxu0 %v703
        %v805 = vpop.f32.mrb[0].mxu0
        %v806 = vadd.f32 0.0, %v805
        %v807 = vpop.f32.mrb[0].mxu0
        %808 = vmatprep.mubr.f32.mxu0 0.0
        %809 = vmatmul.mubr.f32.gmra.mrb[0].mxu0 %v704
        %v810 = vpop.f32.mrb[0].mxu0
        %v811 = vadd.f32 0.0, %v810
        %v812 = vpop.f32.mrb[0].mxu0
        %813 = vmatprep.mubr.f32.mxu0 0.0
        %814 = vmatmul.mubr.f32.gmra.mrb[0].mxu0 %v705
        %v815 = vpop.f32.mrb[0].mxu0
        %v816 = vadd.f32 0.0, %v815
        %v817 = vpop.f32.mrb[0].mxu0
        %818 = vmatprep.mubr.f32.mxu0 0.0
        %819 = vmatmul.mubr.f32.gmra.mrb[0].mxu0 %v706
        %v820 = vpop.f32.mrb[0].mxu0
        %v821 = vadd.f32 0.0, %v820
        %v822 = vpop.f32.mrb[0].mxu0
        %823 = vmatprep.mubr.f32.mxu0 0.0
        %824 = vmatmul.mubr.f32.gmra.mrb[0].mxu0 %v707
        %v825 = vpop.f32.mrb[0].mxu0
        %v826 = vadd.f32 0.0, %v825
        %v827 = vpop.f32.mrb[0].mxu0
        %828 = vmatprep.mubr.f32.mxu0 0.0
        %829 = vmatmul.mubr.f32.gmra.mrb[0].mxu0 %v708
        %v830 = vpop.f32.mrb[0].mxu0
        %v831 = vadd.f32 0.0, %v830
        %v832 = vpop.f32.mrb[0].mxu0
        %833 = vmatprep.mubr.f32.mxu0 0.0
        %834 = vmatmul.mubr.f32.gmra.mrb[0].mxu0 %v709
        %v835 = vpop.f32.mrb[0].mxu0
        %v836 = vadd.f32 0.0, %v835
        %v837 = vpop.f32.mrb[0].mxu0
        %838 = vmatprep.mubr.f32.mxu0 0.0
        %839 = vmatmul.mubr.f32.gmra.mrb[0].mxu0 %v710
        %v840 = vpop.f32.mrb[0].mxu0
        %v841 = vadd.f32 0.0, %v840
        %v842 = vpop.f32.mrb[0].mxu0
        %843 = vmatprep.mubr.f32.mxu0 0.0
        %844 = vmatmul.mubr.f32.gmra.mrb[0].mxu0 %v711
        %v845 = vpop.f32.mrb[0].mxu0
        %v846 = vadd.f32 0.0, %v845
        %v847 = vpop.f32.mrb[0].mxu0
        %848 = vmatprep.mubr.f32.mxu0 0.0
        %849 = vmatmul.mubr.f32.gmra.mrb[0].mxu0 %v712
        %v850 = vpop.f32.mrb[0].mxu0
        %v851 = vadd.f32 0.0, %v850
        %v852 = vpop.f32.mrb[0].mxu0
        %853 = vmatprep.mubr.f32.mxu0 0.0
        %854 = vmatmul.mubr.f32.gmra.mrb[0].mxu0 %v713
        %v855 = vpop.f32.mrb[0].mxu0
        %v856 = vadd.f32 0.0, %v855
        %v857 = vpop.f32.mrb[0].mxu0
        %858 = vmatprep.mubr.f32.mxu0 0.0
        %859 = vmatmul.mubr.f32.gmra.mrb[0].mxu0 %v714
        %v860 = vpop.f32.mrb[0].mxu0
        %v861 = vadd.f32 0.0, %v860
        %v862 = vpop.f32.mrb[0].mxu0
        %863 = vmatprep.mubr.f32.mxu0 0.0
        %864 = vmatmul.mubr.f32.gmra.mrb[0].mxu0 %v715
        %v865 = vpop.f32.mrb[0].mxu0
        %v866 = vadd.f32 0.0, %v865
        %v867 = vpop.f32.mrb[0].mxu0
        %868 = vmatprep.mubr.f32.mxu0 0.0
        %869 = vmatmul.mubr.f32.gmra.mrb[0].mxu0 %v716
        %v870 = vpop.f32.mrb[0].mxu0
        %v871 = vadd.f32 0.0, %v870
        %v872 = vpop.f32.mrb[0].mxu0
        %873 = vmatprep.mubr.f32.mxu0 0.0
        %874 = vmatmul.mubr.f32.gmra.mrb[0].mxu0 %v717
        %v875 = vpop.f32.mrb[0].mxu0
        %v876 = vadd.f32 0.0, %v875
        %v877 = vpop.f32.mrb[0].mxu0
        %878 = vdwg.mxu0
        %v879 = vadd.f32 %v670, %v801
        %v880 = vadd.f32 %v671, %v806
        %v881 = vadd.f32 %v672, %v811
        %v882 = vadd.f32 %v673, %v816
        %v883 = vadd.f32 %v674, %v821
        %v884 = vadd.f32 %v675, %v826
        %v885 = vadd.f32 %v676, %v831
        %v886 = vadd.f32 %v677, %v836
        %v887 = vadd.f32 %v678, %v841
        %v888 = vadd.f32 %v679, %v846
        %v889 = vadd.f32 %v680, %v851
        %v890 = vadd.f32 %v681, %v856
        %v891 = vadd.f32 %v682, %v861
        %v892 = vadd.f32 %v683, %v866
        %v893 = vadd.f32 %v684, %v871
        %v894 = vadd.f32 %v685, %v876
        %895 = vst [vmem:[#allocation7] sm:$0xff] %v879
        %896 = vst [vmem:[#allocation7 + $0x8] sm:$0xff] %v880
        %897 = vst [vmem:[#allocation7 + $0x10] sm:$0xff] %v881
        %898 = vst [vmem:[#allocation7 + $0x18] sm:$0xff] %v882
        %899 = vst [vmem:[#allocation7 + $0x20] sm:$0xff] %v883
        %900 = vst [vmem:[#allocation7 + $0x28] sm:$0xff] %v884
        %901 = vst [vmem:[#allocation7 + $0x30] sm:$0xff] %v885
        %902 = vst [vmem:[#allocation7 + $0x38] sm:$0xff] %v886
        %903 = vst [vmem:[#allocation7 + $0x40] sm:$0xff] %v887
        %904 = vst [vmem:[#allocation7 + $0x48] sm:$0xff] %v888
        %905 = vst [vmem:[#allocation7 + $0x50] sm:$0xff] %v889
        %906 = vst [vmem:[#allocation7 + $0x58] sm:$0xff] %v890
        %907 = vst [vmem:[#allocation7 + $0x60] sm:$0xff] %v891
        %908 = vst [vmem:[#allocation7 + $0x68] sm:$0xff] %v892
        %909 = vst [vmem:[#allocation7 + $0x70] sm:$0xff] %v893
        %910 = vst [vmem:[#allocation7 + $0x78] sm:$0xff] %v894
        %p911 = scmp.eq.s32.totalorder %s29, 2
        %p912 = pnand %p911, %p431
        %p913 = pneg %p912
        // Predicated region
        $region61: #{tpu_custom_call.1} parent=47 // pred_check
          _
        $region62: #{tpu_custom_call.1} parent=47 // pred_check_branch
          %915 = sbr.rel (%p912) target = $region64
        $region63: #{tpu_custom_call.1} parent=47 // pred_region
          %v916 = vld [vmem:[%s427] sm:$0xff]
          %v917 = vld [vmem:[%s427 + $0x8] sm:$0xff]
          %v918 = vld [vmem:[%s427 + $0x10] sm:$0xff]
          %v919 = vld [vmem:[%s427 + $0x18] sm:$0xff]
          %v920 = vld [vmem:[%s427 + $0x20] sm:$0xff]
          %v921 = vld [vmem:[%s427 + $0x28] sm:$0xff]
          %v922 = vld [vmem:[%s427 + $0x30] sm:$0xff]
          %v923 = vld [vmem:[%s427 + $0x38] sm:$0xff]
          %v924 = vld [vmem:[%s427 + $0x40] sm:$0xff]
          %v925 = vld [vmem:[%s427 + $0x48] sm:$0xff]
          %v926 = vld [vmem:[%s427 + $0x50] sm:$0xff]
          %v927 = vld [vmem:[%s427 + $0x58] sm:$0xff]
          %v928 = vld [vmem:[%s427 + $0x60] sm:$0xff]
          %v929 = vld [vmem:[%s427 + $0x68] sm:$0xff]
          %v930 = vld [vmem:[%s427 + $0x70] sm:$0xff]
          %v931 = vld [vmem:[%s427 + $0x78] sm:$0xff]
          %vm932 = vcmp.ne.s32.totalorder %v916, 4294967295
          %vm933 = vcmp.ne.s32.totalorder %v917, 4294967295
          %vm934 = vcmp.ne.s32.totalorder %v918, 4294967295
          %vm935 = vcmp.ne.s32.totalorder %v919, 4294967295
          %vm936 = vcmp.ne.s32.totalorder %v920, 4294967295
          %vm937 = vcmp.ne.s32.totalorder %v921, 4294967295
          %vm938 = vcmp.ne.s32.totalorder %v922, 4294967295
          %vm939 = vcmp.ne.s32.totalorder %v923, 4294967295
          %vm940 = vcmp.ne.s32.totalorder %v924, 4294967295
          %vm941 = vcmp.ne.s32.totalorder %v925, 4294967295
          %vm942 = vcmp.ne.s32.totalorder %v926, 4294967295
          %vm943 = vcmp.ne.s32.totalorder %v927, 4294967295
          %vm944 = vcmp.ne.s32.totalorder %v928, 4294967295
          %vm945 = vcmp.ne.s32.totalorder %v929, 4294967295
          %vm946 = vcmp.ne.s32.totalorder %v930, 4294967295
          %vm947 = vcmp.ne.s32.totalorder %v931, 4294967295
          %v948 = vld [vmem:[#allocation5] sm:$0xff]
          %v949 = vld [vmem:[#allocation5 + $0x8] sm:$0xff]
          %v950 = vld [vmem:[#allocation5 + $0x10] sm:$0xff]
          %v951 = vld [vmem:[#allocation5 + $0x18] sm:$0xff]
          %v952 = vld [vmem:[#allocation5 + $0x20] sm:$0xff]
          %v953 = vld [vmem:[#allocation5 + $0x28] sm:$0xff]
          %v954 = vld [vmem:[#allocation5 + $0x30] sm:$0xff]
          %v955 = vld [vmem:[#allocation5 + $0x38] sm:$0xff]
          %v956 = vld [vmem:[#allocation5 + $0x40] sm:$0xff]
          %v957 = vld [vmem:[#allocation5 + $0x48] sm:$0xff]
          %v958 = vld [vmem:[#allocation5 + $0x50] sm:$0xff]
          %v959 = vld [vmem:[#allocation5 + $0x58] sm:$0xff]
          %v960 = vld [vmem:[#allocation5 + $0x60] sm:$0xff]
          %v961 = vld [vmem:[#allocation5 + $0x68] sm:$0xff]
          %v962 = vld [vmem:[#allocation5 + $0x70] sm:$0xff]
          %v963 = vld [vmem:[#allocation5 + $0x78] sm:$0xff]
          %v964 = vld [vmem:[#allocation7] sm:$0xff]
          %v965 = vld [vmem:[#allocation7 + $0x8] sm:$0xff]
          %v966 = vld [vmem:[#allocation7 + $0x10] sm:$0xff]
          %v967 = vld [vmem:[#allocation7 + $0x18] sm:$0xff]
          %v968 = vld [vmem:[#allocation7 + $0x20] sm:$0xff]
          %v969 = vld [vmem:[#allocation7 + $0x28] sm:$0xff]
          %v970 = vld [vmem:[#allocation7 + $0x30] sm:$0xff]
          %v971 = vld [vmem:[#allocation7 + $0x38] sm:$0xff]
          %v972 = vld [vmem:[#allocation7 + $0x40] sm:$0xff]
          %v973 = vld [vmem:[#allocation7 + $0x48] sm:$0xff]
          %v974 = vld [vmem:[#allocation7 + $0x50] sm:$0xff]
          %v975 = vld [vmem:[#allocation7 + $0x58] sm:$0xff]
          %v976 = vld [vmem:[#allocation7 + $0x60] sm:$0xff]
          %v977 = vld [vmem:[#allocation7 + $0x68] sm:$0xff]
          %v978 = vld [vmem:[#allocation7 + $0x70] sm:$0xff]
          %v979 = vld [vmem:[#allocation7 + $0x78] sm:$0xff]
          %v980 = vsel %vm932, 1, 0
          %v981 = vsel %vm933, 1, 0
          %v982 = vsel %vm934, 1, 0
          %v983 = vsel %vm935, 1, 0
          %v984 = vsel %vm936, 1, 0
          %v985 = vsel %vm937, 1, 0
          %v986 = vsel %vm938, 1, 0
          %v987 = vsel %vm939, 1, 0
          %v988 = vsel %vm940, 1, 0
          %v989 = vsel %vm941, 1, 0
          %v990 = vsel %vm942, 1, 0
          %v991 = vsel %vm943, 1, 0
          %v992 = vsel %vm944, 1, 0
          %v993 = vsel %vm945, 1, 0
          %v994 = vsel %vm946, 1, 0
          %v995 = vsel %vm947, 1, 0
          %996 = vset.pattern.permute.xlu0 0
          %997 = vperm.xlu0 %996, %v980
          %v998 = vpop.permute.xlu0 %997
          %999 = vset.pattern.permute.xlu0 0
          %1000 = vperm.xlu0 %999, %v981
          %v1001 = vpop.permute.xlu0 %1000
          %1002 = vset.pattern.permute.xlu0 0
          %1003 = vperm.xlu0 %1002, %v982
          %v1004 = vpop.permute.xlu0 %1003
          %1005 = vset.pattern.permute.xlu0 0
          %1006 = vperm.xlu0 %1005, %v983
          %v1007 = vpop.permute.xlu0 %1006
          %1008 = vset.pattern.permute.xlu0 0
          %1009 = vperm.xlu0 %1008, %v984
          %v1010 = vpop.permute.xlu0 %1009
          %1011 = vset.pattern.permute.xlu0 0
          %1012 = vperm.xlu0 %1011, %v985
          %v1013 = vpop.permute.xlu0 %1012
          %1014 = vset.pattern.permute.xlu0 0
          %1015 = vperm.xlu0 %1014, %v986
          %v1016 = vpop.permute.xlu0 %1015
          %1017 = vset.pattern.permute.xlu0 0
          %1018 = vperm.xlu0 %1017, %v987
          %v1019 = vpop.permute.xlu0 %1018
          %1020 = vset.pattern.permute.xlu0 0
          %1021 = vperm.xlu0 %1020, %v988
          %v1022 = vpop.permute.xlu0 %1021
          %1023 = vset.pattern.permute.xlu0 0
          %1024 = vperm.xlu0 %1023, %v989
          %v1025 = vpop.permute.xlu0 %1024
          %1026 = vset.pattern.permute.xlu0 0
          %1027 = vperm.xlu0 %1026, %v990
          %v1028 = vpop.permute.xlu0 %1027
          %1029 = vset.pattern.permute.xlu0 0
          %1030 = vperm.xlu0 %1029, %v991
          %v1031 = vpop.permute.xlu0 %1030
          %1032 = vset.pattern.permute.xlu0 0
          %1033 = vperm.xlu0 %1032, %v992
          %v1034 = vpop.permute.xlu0 %1033
          %1035 = vset.pattern.permute.xlu0 0
          %1036 = vperm.xlu0 %1035, %v993
          %v1037 = vpop.permute.xlu0 %1036
          %1038 = vset.pattern.permute.xlu0 0
          %1039 = vperm.xlu0 %1038, %v994
          %v1040 = vpop.permute.xlu0 %1039
          %1041 = vset.pattern.permute.xlu0 0
          %1042 = vperm.xlu0 %1041, %v995
          %v1043 = vpop.permute.xlu0 %1042
          %vm1044 = vcmp.eq.s32.totalorder %v998, 1
          %vm1045 = vcmp.eq.s32.totalorder %v1001, 1
          %vm1046 = vcmp.eq.s32.totalorder %v1004, 1
          %vm1047 = vcmp.eq.s32.totalorder %v1007, 1
          %vm1048 = vcmp.eq.s32.totalorder %v1010, 1
          %vm1049 = vcmp.eq.s32.totalorder %v1013, 1
          %vm1050 = vcmp.eq.s32.totalorder %v1016, 1
          %vm1051 = vcmp.eq.s32.totalorder %v1019, 1
          %vm1052 = vcmp.eq.s32.totalorder %v1022, 1
          %vm1053 = vcmp.eq.s32.totalorder %v1025, 1
          %vm1054 = vcmp.eq.s32.totalorder %v1028, 1
          %vm1055 = vcmp.eq.s32.totalorder %v1031, 1
          %vm1056 = vcmp.eq.s32.totalorder %v1034, 1
          %vm1057 = vcmp.eq.s32.totalorder %v1037, 1
          %vm1058 = vcmp.eq.s32.totalorder %v1040, 1
          %vm1059 = vcmp.eq.s32.totalorder %v1043, 1
          %v1060 = vsel %vm1044, %v948, %v964
          %v1061 = vsel %vm1045, %v949, %v965
          %v1062 = vsel %vm1046, %v950, %v966
          %v1063 = vsel %vm1047, %v951, %v967
          %v1064 = vsel %vm1048, %v952, %v968
          %v1065 = vsel %vm1049, %v953, %v969
          %v1066 = vsel %vm1050, %v954, %v970
          %v1067 = vsel %vm1051, %v955, %v971
          %v1068 = vsel %vm1052, %v956, %v972
          %v1069 = vsel %vm1053, %v957, %v973
          %v1070 = vsel %vm1054, %v958, %v974
          %v1071 = vsel %vm1055, %v959, %v975
          %v1072 = vsel %vm1056, %v960, %v976
          %v1073 = vsel %vm1057, %v961, %v977
          %v1074 = vsel %vm1058, %v962, %v978
          %v1075 = vsel %vm1059, %v963, %v979
          %1076 = vst [vmem:[#allocation7] sm:$0xff] %v1060
          %1077 = vst [vmem:[#allocation7 + $0x8] sm:$0xff] %v1061
          %1078 = vst [vmem:[#allocation7 + $0x10] sm:$0xff] %v1062
          %1079 = vst [vmem:[#allocation7 + $0x18] sm:$0xff] %v1063
          %1080 = vst [vmem:[#allocation7 + $0x20] sm:$0xff] %v1064
          %1081 = vst [vmem:[#allocation7 + $0x28] sm:$0xff] %v1065
          %1082 = vst [vmem:[#allocation7 + $0x30] sm:$0xff] %v1066
          %1083 = vst [vmem:[#allocation7 + $0x38] sm:$0xff] %v1067
          %1084 = vst [vmem:[#allocation7 + $0x40] sm:$0xff] %v1068
          %1085 = vst [vmem:[#allocation7 + $0x48] sm:$0xff] %v1069
          %1086 = vst [vmem:[#allocation7 + $0x50] sm:$0xff] %v1070
          %1087 = vst [vmem:[#allocation7 + $0x58] sm:$0xff] %v1071
          %1088 = vst [vmem:[#allocation7 + $0x60] sm:$0xff] %v1072
          %1089 = vst [vmem:[#allocation7 + $0x68] sm:$0xff] %v1073
          %1090 = vst [vmem:[#allocation7 + $0x70] sm:$0xff] %v1074
          %1091 = vst [vmem:[#allocation7 + $0x78] sm:$0xff] %v1075
        $region64: #{tpu_custom_call.1} parent=47 // pred_fallthru
          _
        // Predicated region
        $region65: #{tpu_custom_call.1} parent=47 // pred_check
          %p1092 = pneg %p238
        $region66: #{tpu_custom_call.1} parent=47 // pred_check_branch
          %1094 = sbr.rel (%p1092) target = $region68
        $region67: #{tpu_custom_call.1} parent=47 // pred_region
          %s1095 = smul.u32 16, %s28
          %s1097 = ssub.s32 2048, 2048
          %1098 = vsyncadd [#allocation4], %s1097
          %s1099 = smul.addr %s1095, 128
          %s1100 = scalar_lea.hbm %s7, %s1099
          %s1101 = sshll.u32 [#allocation7], 4
          %s1102 = int_to_ptr.vmem [resolvable:$true] %s1101
          %1107 = dma.vmem_to_hbm [thread:$0]  %s1102, 2048, %s1100, [#allocation4], 128, 128, 8
        $region68: #{tpu_custom_call.1} parent=47 // pred_fallthru
          _
        // Predicated region
        $region69: #{tpu_custom_call.1} parent=47 // pred_check
          %p1108 = pneg %p238
        $region70: #{tpu_custom_call.1} parent=47 // pred_check_branch
          %1110 = sbr.rel (%p1108) target = $region72
        $region71: #{tpu_custom_call.1} parent=47 // pred_region
          %1111 = dma.done [#allocation4], 2048
        $region72: #{tpu_custom_call.1} parent=47 // pred_fallthru
          _
      $region48: #{tpu_custom_call.1} parent=5 // pred_fallthru
        _
      %p1112 = scmp.le.s32.totalorder 2, %s18
      // Predicated region
      $region73: #{tpu_custom_call.1} parent=5 // pred_check
        %p1113 = pneg %p1112
      $region74: #{tpu_custom_call.1} parent=5 // pred_check_branch
        %1115 = sbr.rel (%p1113) target = $region76
      $region75: #{tpu_custom_call.1} parent=5 // pred_region
        %s1116 = ssub.s32 %s18, 2
      $region76: #{tpu_custom_call.1} parent=5 // pred_fallthru
        _
    $region6: #{tpu_custom_call.1} parent=1 // loop_footer
      %s22 = sadd.s32 1, %s18
    $region7: #{tpu_custom_call.1} parent=1 // loop_footer_branch
      %17 = sbr.rel target = $region3
    $region8: #{tpu_custom_call.1} parent=1 // loop_exit
      _
    %1117 = vsyncpa [#allocation3], 1
    %s1118 = scalar_lea.sflag [#allocation3], 1
    %1119 = vsyncpa %s1118, 1
    %1120 = vsyncpa [#allocation6], 1
    %1121 = vsyncpa [#allocation4], 1
    %s1122 = scalar_lea.sflag [#allocation4], 1
    %1123 = vsyncpa %s1122, 1

</llo_original>
